<compile_context>
chip_gen: v5e
topology: v5e:2x2
jax: 0.10.0
libtpu: 0.0.40
codegen_flags: <defaults>
</compile_context>

<pallas_src>
import functools

import jax
import jax.numpy as jnp
from jax import lax
from jax.experimental import pallas as pl
from jax.experimental.pallas import tpu as pltpu


def _conv1d_kernel(x_ref, w_ref, b_ref, o_ref, xcol_ref, *,
                   kernel_size, stride, padding, l_in, l_out,
                   c_in, c_in_pad, batch_block, compute_dtype):
    """One grid step: `batch_block` samples, full length, fused-tap matmul.

    x_ref   : (batch_block, C_in, L)        NCL activations
    w_ref   : (C_out, K * C_in_pad)         fused-tap weights, (k, c_in) cols
    b_ref   : (C_out, 1)                    bias
    o_ref   : (batch_block, C_out, L_out)   relu(conv) output
    xcol_ref: (K * C_in_pad, L_out)         VMEM im2col scratch
    """
    # Zero the im2col slab once per grid step: the zero-padding border columns
    # of the edge taps and the padded channel rows are never written below, so
    # they must stay 0.  Zeroing per step (not under program_id == 0) keeps
    # this correct when the parallel grid axis is split across TensorCores.
    xcol_ref[...] = jnp.zeros_like(xcol_ref)

    for i in range(batch_block):                         # static, small unroll
        xi = x_ref[i]                                    # (C_in, L)
        # Build the im2col slab: row block k holds x[:, l*stride + k - padding]
        # for the output positions l where that index is in-bounds.
        for k in range(kernel_size):
            l_lo = max(0, -((k - padding) // stride))    # ceil((padding-k)/stride)
            l_hi = min(l_out - 1, (l_in - 1 - k + padding) // stride)
            n = l_hi - l_lo + 1
            if n <= 0:                                   # tap entirely in halo
                continue
            src = l_lo * stride + k - padding            # >= 0, static
            if stride == 1:
                win = xi[:, src:src + n]
            else:
                # TODO(synk): stride > 1 uses a strided lane slice; only the
                # stride == 1 path is exercised/verified by the demo below.
                win = xi[:, src:src + stride * (n - 1) + 1:stride]
            r0 = k * c_in_pad                            # 8-aligned sublane offset
            xcol_ref[r0:r0 + c_in, l_lo:l_lo + n] = win.astype(compute_dtype)

        # Single fused MXU matmul over the K*C_in_pad contraction, f32 accum.
        acc = jnp.dot(w_ref[...], xcol_ref[...],
                      preferred_element_type=jnp.float32)      # (C_out, L_out)
        acc = acc + b_ref[...].astype(jnp.float32)             # broadcast over L
        o_ref[i] = jnp.maximum(acc, 0.0).astype(o_ref.dtype)   # F.relu


def _pick_batch_block(batch, bytes_per_sample, vmem_budget=8 * 1024 * 1024):
    """Largest divisor of `batch` (<= 8) whose double-buffered blocks fit the
    budget, preferring >= 2 grid steps so both v7x TensorCores get work."""
    divisors = [d for d in range(min(batch, 8), 0, -1) if batch % d == 0]
    fitting = [d for d in divisors if 2 * d * bytes_per_sample <= vmem_budget] or [1]
    two_step = [d for d in fitting if batch // d >= 2]
    return (two_step or fitting)[0]


def conv1d_pallas(x_ncl, weight, bias, *, stride=1, padding=1, compute_dtype=None):
    """x_ncl: (B, C_in, L); weight: (C_out, C_in, K); bias: (C_out,).
    Returns relu(conv1d(x)) in NCL layout: (B, C_out, L_out)."""
    B, C_in, L = x_ncl.shape
    C_out, _, K = weight.shape
    L_out = (L + 2 * padding - (K - 1) - 1) // stride + 1
    if compute_dtype is None:
        # Set to jnp.bfloat16 on v6e/v7x for full-rate MXU (f32 accumulation).
        compute_dtype = x_ncl.dtype
    compute_dtype = jnp.dtype(compute_dtype)

    # Fused-tap weight (tiny, parameter-only glue):
    # (C_out, C_in, K) -> (C_out, K, C_in) -> zero-pad C_in to a sublane
    # multiple -> (C_out, K * C_in_pad); column order matches the im2col rows.
    C_in_pad = ((C_in + 7) // 8) * 8
    w_t = jnp.transpose(weight, (0, 2, 1)).astype(compute_dtype)
    w2 = jnp.pad(w_t, ((0, 0), (0, 0), (0, C_in_pad - C_in)))
    w2 = w2.reshape(C_out, K * C_in_pad)
    b2 = bias.reshape(C_out, 1)

    itemsize = jnp.dtype(x_ncl.dtype).itemsize
    batch_block = _pick_batch_block(B, (C_in * L + C_out * L_out) * itemsize)
    grid = (B // batch_block,)

    kernel = functools.partial(
        _conv1d_kernel, kernel_size=K, stride=stride, padding=padding,
        l_in=L, l_out=L_out, c_in=C_in, c_in_pad=C_in_pad,
        batch_block=batch_block, compute_dtype=compute_dtype)

    out = pl.pallas_call(
        kernel,
        out_shape=jax.ShapeDtypeStruct((B, C_out, L_out), x_ncl.dtype),
        grid_spec=pltpu.PrefetchScalarGridSpec(
            num_scalar_prefetch=0,
            grid=grid,
            in_specs=[
                pl.BlockSpec((batch_block, C_in, L), lambda b: (b, 0, 0)),
                pl.BlockSpec((C_out, K * C_in_pad), lambda b: (0, 0)),
                pl.BlockSpec((C_out, 1), lambda b: (0, 0)),
            ],
            out_specs=pl.BlockSpec((batch_block, C_out, L_out),
                                   lambda b: (b, 0, 0)),
            scratch_shapes=[pltpu.VMEM((K * C_in_pad, L_out), compute_dtype)],
        ),
        compiler_params=pltpu.CompilerParams(
            dimension_semantics=("parallel",)),
        cost_estimate=pl.CostEstimate(
            flops=2 * B * L_out * C_out * K * C_in,
            transcendentals=0,
            bytes_accessed=(x_ncl.size * itemsize
                            + int(w2.size) * compute_dtype.itemsize
                            + int(b2.size) * jnp.dtype(bias.dtype).itemsize
                            + B * C_out * L_out * itemsize)),
    )(x_ncl, w2, b2)
    return out


def conv1d_module_forward(x, x_length, weight, bias, *, kernel_size, stride=1,
                          padding=1, tracking=True):
    """Mirrors Conv1d.forward with tracking=True and activation=F.relu."""
    fmap = conv1d_pallas(x, weight, bias, stride=stride, padding=padding)
    if tracking:
        # NOTE: reference uses true division '/', so length becomes float.
        fmap_length = (x_length.astype(jnp.float32) + 2 * padding
                       - (kernel_size - 1) - 1) / stride + 1
        return fmap, fmap_length
    return fmap


if __name__ == "__main__":
    key = jax.random.PRNGKey(0)
    B, C_in, L = 2, 4, 16
    C_out, K, stride, padding = 8, 3, 1, 1

    kx, kw, kb = jax.random.split(key, 3)
    x = jax.random.normal(kx, (B, C_in, L), dtype=jnp.float32)
    x_length = jnp.array([16, 12], dtype=jnp.int32)
    # deterministic parameter init (PyTorch-style uniform bound 1/sqrt(C_in*K))
    bound = 1.0 / jnp.sqrt(jnp.float32(C_in * K))
    weight = jax.random.uniform(kw, (C_out, C_in, K), jnp.float32, -bound, bound)
    bias = jax.random.uniform(kb, (C_out,), jnp.float32, -bound, bound)

    fmap, fmap_length = conv1d_module_forward(
        x, x_length, weight, bias,
        kernel_size=K, stride=stride, padding=padding, tracking=True)
    fmap = jax.block_until_ready(fmap)
    fmap_length = jax.block_until_ready(fmap_length)

    # cross-check against XLA's conv (relu(conv1d(x)))
    ref = lax.conv_general_dilated(
        x, weight, window_strides=(stride,), padding=[(padding, padding)],
        dimension_numbers=("NCH", "OIH", "NCH"))
    ref = jnp.maximum(ref + bias[None, :, None], 0.0)
    assert fmap.shape == (B, C_out, (L + 2 * padding - (K - 1) - 1) // stride + 1)
    assert jnp.allclose(fmap, ref, atol=1e-5, rtol=1e-5)
    assert jnp.allclose(fmap_length,
                        (x_length.astype(jnp.float32) + 2 * padding - K) / stride + 1)

    print("KERNEL_OK")
</pallas_src>

<mosaic_0001>
module attributes {stable_mosaic.version = 11 : i64} {
  func.func @_conv1d_kernel(%arg0: i32, %arg1: memref<1x4x16xf32, #tpu.memory_space<vmem>>, %arg2: memref<8x24xf32, #tpu.memory_space<vmem>>, %arg3: memref<8x1xf32, #tpu.memory_space<vmem>>, %arg4: memref<1x8x16xf32, #tpu.memory_space<vmem>>, %arg5: memref<24x16xf32, #tpu.memory_space<vmem>>) attributes {dimension_semantics = [#tpu.dimension_semantics<parallel>], iteration_bounds = array<i64: 2>, scalar_prefetch = 0 : i64, scratch_operands = 1 : i64, tpu.core_type = #tpu.core_type<tc>, window_params = [{transform_indices = @transform_0, window_bounds = array<i64: 1, 4, 16>}, {pipeline_mode = #tpu.pipeline_mode<synchronous>, transform_indices = @transform_1, window_bounds = array<i64: 8, 24>}, {pipeline_mode = #tpu.pipeline_mode<synchronous>, transform_indices = @transform_2, window_bounds = array<i64: 8, 1>}, {transform_indices = @transform_3, window_bounds = array<i64: 1, 8, 16>}]} {
    %cst = arith.constant 0.000000e+00 : f32
    %0 = vector.broadcast %cst : f32 to vector<24x16xf32>
    %c0 = arith.constant 0 : index
    %c0_0 = arith.constant 0 : index
    %1 = vector.load %arg5[%c0, %c0_0] : memref<24x16xf32, #tpu.memory_space<vmem>>, vector<24x16xf32>
    tpu.vector_store %arg5[%c0, %c0_0], %0 {strides = array<i32>} : memref<24x16xf32, #tpu.memory_space<vmem>>, vector<24x16xf32>,
    %c0_1 = arith.constant 0 : index
    %c0_2 = arith.constant 0 : index
    %c0_3 = arith.constant 0 : index
    %2 = vector.load %arg1[%c0_1, %c0_2, %c0_3] : memref<1x4x16xf32, #tpu.memory_space<vmem>>, vector<1x4x16xf32>
    %3 = vector.shape_cast %2 : vector<1x4x16xf32> to vector<4x16xf32>
    %4 = vector.extract_strided_slice %3 {offsets = [0, 0], sizes = [4, 15], strides = [1, 1]} : vector<4x16xf32> to vector<4x15xf32>
    %c0_4 = arith.constant 0 : index
    %c1 = arith.constant 1 : index
    %5 = vector.load %arg5[%c0_4, %c1] : memref<24x16xf32, #tpu.memory_space<vmem>>, vector<4x15xf32>
    tpu.vector_store %arg5[%c0_4, %c1], %4 {strides = array<i32>} : memref<24x16xf32, #tpu.memory_space<vmem>>, vector<4x15xf32>,
    %c8 = arith.constant 8 : index
    %c0_5 = arith.constant 0 : index
    %6 = vector.load %arg5[%c8, %c0_5] : memref<24x16xf32, #tpu.memory_space<vmem>>, vector<4x16xf32>
    tpu.vector_store %arg5[%c8, %c0_5], %3 {strides = array<i32>} : memref<24x16xf32, #tpu.memory_space<vmem>>, vector<4x16xf32>,
    %7 = vector.extract_strided_slice %3 {offsets = [0, 1], sizes = [4, 15], strides = [1, 1]} : vector<4x16xf32> to vector<4x15xf32>
    %c16 = arith.constant 16 : index
    %c0_6 = arith.constant 0 : index
    %8 = vector.load %arg5[%c16, %c0_6] : memref<24x16xf32, #tpu.memory_space<vmem>>, vector<4x15xf32>
    tpu.vector_store %arg5[%c16, %c0_6], %7 {strides = array<i32>} : memref<24x16xf32, #tpu.memory_space<vmem>>, vector<4x15xf32>,
    %c0_7 = arith.constant 0 : index
    %c0_8 = arith.constant 0 : index
    %9 = vector.load %arg2[%c0_7, %c0_8] : memref<8x24xf32, #tpu.memory_space<vmem>>, vector<8x24xf32>
    %c0_9 = arith.constant 0 : index
    %c0_10 = arith.constant 0 : index
    %10 = vector.load %arg5[%c0_9, %c0_10] : memref<24x16xf32, #tpu.memory_space<vmem>>, vector<24x16xf32>
    %cst_11 = arith.constant dense<0.000000e+00> : vector<8x16xf32>
    %11 = tpu.matmul %9, %10, %cst_11 {dimension_numbers = #tpu.dot_dimension_numbers<[1], [0], [0], [1], [0, 0, 1, 1], [], []>} : vector<8x24xf32>, vector<24x16xf32>, vector<8x16xf32> -> vector<8x16xf32>
    %c0_12 = arith.constant 0 : index
    %c0_13 = arith.constant 0 : index
    %12 = vector.load %arg3[%c0_12, %c0_13] : memref<8x1xf32, #tpu.memory_space<vmem>>, vector<8x1xf32>
    %13 = vector.broadcast %12 : vector<8x1xf32> to vector<8x16xf32>
    %14 = arith.addf %11, %13 : vector<8x16xf32>
    %cst_14 = arith.constant 0.000000e+00 : f32
    %15 = vector.broadcast %cst_14 : f32 to vector<8x16xf32>
    %16 = arith.maximumf %14, %15 : vector<8x16xf32>
    %c0_15 = arith.constant 0 : index
    %c0_16 = arith.constant 0 : index
    %c0_17 = arith.constant 0 : index
    %17 = vector.load %arg4[%c0_15, %c0_16, %c0_17] : memref<1x8x16xf32, #tpu.memory_space<vmem>>, vector<1x8x16xf32>
    %18 = vector.shape_cast %17 : vector<1x8x16xf32> to vector<8x16xf32>
    %19 = vector.shape_cast %16 : vector<8x16xf32> to vector<1x8x16xf32>
    tpu.vector_store %arg4[%c0_15, %c0_16, %c0_17], %19 {strides = array<i32>} : memref<1x8x16xf32, #tpu.memory_space<vmem>>, vector<1x8x16xf32>,
    return
  }
  func.func @transform_0(%arg0: i32) -> (i32, i32, i32) {
    %c0_i32 = arith.constant 0 : i32
    %c0_i32_0 = arith.constant 0 : i32
    %c0_i32_1 = arith.constant 0 : i32
    return %arg0, %c0_i32, %c0_i32_0 : i32, i32, i32
  }
  func.func @transform_1(%arg0: i32) -> (i32, i32) {
    %c0_i32 = arith.constant 0 : i32
    %c0_i32_0 = arith.constant 0 : i32
    %c0_i32_1 = arith.constant 0 : i32
    return %c0_i32, %c0_i32_0 : i32, i32
  }
  func.func @transform_2(%arg0: i32) -> (i32, i32) {
    %c0_i32 = arith.constant 0 : i32
    %c0_i32_0 = arith.constant 0 : i32
    %c0_i32_1 = arith.constant 0 : i32
    return %c0_i32, %c0_i32_0 : i32, i32
  }
  func.func @transform_3(%arg0: i32) -> (i32, i32, i32) {
    %c0_i32 = arith.constant 0 : i32
    %c0_i32_0 = arith.constant 0 : i32
    %c0_i32_1 = arith.constant 0 : i32
    return %arg0, %c0_i32, %c0_i32_0 : i32, i32, i32
  }
}

</mosaic_0001>

<llo_original>
// kernel: tpu_custom_call.1
$region0: #{tpu_custom_call.1}
  #allocation0 [shape = 'u32[]', space=smem, size = 0x4, offset = 0x4, fixed_abs, tag = 'smem constant byte address 0x4 - core index']
  #allocation1 [shape = 'u32[72,128]{1,0:T(1,128)}', space=vmem, size = 0x9000, scoped, tag = 'internal scratch']
  #allocation2 [shape = 'f32[24,16]{1,0:T(8,128)}', space=vmem, size = 0x3000, scoped, tag = 'scratch operand']
  %s0 = inlined_call_operand.vmem [shape: f32[2,4,16], index: 0, kind: input, shape index: {}]
  %s1 = inlined_call_operand.hbm [shape: f32[8,24], index: 1, kind: input, shape index: {}]
  %s2 = inlined_call_operand.vmem [shape: f32[8,1], index: 2, kind: input, shape index: {}]
  %s3 = inlined_call_operand.hbm [shape: f32[2,8,16], index: 3, kind: output, shape index: {}]
  %s4 = sld [smem:[#allocation0]]
  $region49: #{tpu_custom_call.1} parent=0
    _
  %s6 = ssub.s32 1, %s4
  %s7 = scalar_select 0, %s6, %s4
  $region1: #{tpu_custom_call.1} parent=0
    #allocation3 [shape = 'u8[4096]{0}', space=vmem, size = 0x1000, scoped, tag = 'input window, operand 1, single buffered']
    #allocation4 [shape = 's32[2]{0}', space=sflag, size = 0x8, scoped, tag = 'scoped memory for tpu_custom_call.1']
    #allocation5 [shape = 's32[2]{0}', space=sflag, size = 0x8, scoped, tag = 'scoped memory for tpu_custom_call.1']
    #allocation6 [shape = 'u8[8192]{0}', space=vmem, size = 0x2000, scoped, tag = 'output window, operand 0']
    %8 = vsyncpa [#allocation4], 0
    %9 = vsyncpa [#allocation5], 0
    %s10 = scalar_lea.sflag [#allocation5], 1
    %11 = vsyncpa %s10, 0
    loop: start=0, step=1, limit=4
    $region2: #{tpu_custom_call.1} parent=1 // loop_pre_header
      _
    $region3: #{tpu_custom_call.1} parent=1 // loop_header
      %s13 = sphi 0, %s17
      %p14 = scmp.ge.s32.totalorder %s13, 4
      %s23 = sphi 0, %s25
      %s26 = sphi 0, %s23
      %s27 = sphi 0, %s26
      %s43 = sphi 0, %s27
      %s47 = sphi 0, %s47
      %s49 = sphi 0, %s47
      %s50 = sphi 0, %s49
      %s64 = sphi 0, %s50
      %s68 = sphi 0, %s68
      %s70 = sphi 0, %s68
      %s71 = sphi 0, %s70
      %s85 = sphi 0, %s71
      %s91 = sphi 0, %s93
      %s94 = sphi 0, %s91
      %s95 = sphi 0, %s94
      %s111 = sphi 0, %s95
    $region4: #{tpu_custom_call.1} parent=1 // loop_header_branch
      %16 = sbr.rel (%p14) target = $region8
    $region5: #{tpu_custom_call.1} parent=1 // loop_body
      %s18 = ssub.s32 %s13, 1
      %s19 = ssub.s32 %s13, 2
      %s20 = sadd.s32 %s13, 1
      %s21 = ssub.s32 %s13, %s20
      %p22 = scmp.eq.s32.totalorder %s21, 0
      %s24 = sadd.s32 %s23, 1
      %s25 = scalar_select %p22, %s23, %s24
      %p28 = pneg %p22
      %p29 = scmp.eq.s32.totalorder %s13, 1
      %p30 = por %p28, %p29
      %p31 = scmp.ne.s32.totalorder %s23, %s26
      %p32 = scmp.eq.s32.totalorder %s13, 0
      %p33 = por %p31, %p32
      %p34 = scmp.ne.s32.totalorder %s23, %s26
      %p35 = scmp.eq.s32.totalorder %s18, 1
      %p36 = por %p34, %p35
      %p37 = scmp.ne.s32.totalorder %s26, %s27
      %p38 = scmp.eq.s32.totalorder %s18, 0
      %p39 = por %p37, %p38
      %p40 = scmp.ne.s32.totalorder %s26, %s27
      %p41 = scmp.eq.s32.totalorder %s19, 1
      %p42 = por %p40, %p41
      %p44 = scmp.ne.s32.totalorder %s27, %s43
      %p45 = scmp.eq.s32.totalorder %s19, 0
      %p46 = por %p44, %p45
      %s48 = sadd.s32 %s47, 1
      %p51 = scmp.eq.s32.totalorder %s13, 1
      %p52 = scmp.ne.s32.totalorder %s47, %s49
      %p53 = scmp.eq.s32.totalorder %s13, 0
      %p54 = por %p52, %p53
      %p55 = scmp.ne.s32.totalorder %s47, %s49
      %p56 = scmp.eq.s32.totalorder %s18, 1
      %p57 = por %p55, %p56
      %p58 = scmp.ne.s32.totalorder %s49, %s50
      %p59 = scmp.eq.s32.totalorder %s18, 0
      %p60 = por %p58, %p59
      %p61 = scmp.ne.s32.totalorder %s49, %s50
      %p62 = scmp.eq.s32.totalorder %s19, 1
      %p63 = por %p61, %p62
      %p65 = scmp.ne.s32.totalorder %s50, %s64
      %p66 = scmp.eq.s32.totalorder %s19, 0
      %p67 = por %p65, %p66
      %s69 = sadd.s32 %s68, 1
      %p72 = scmp.eq.s32.totalorder %s13, 1
      %p73 = scmp.ne.s32.totalorder %s68, %s70
      %p74 = scmp.eq.s32.totalorder %s13, 0
      %p75 = por %p73, %p74
      %p76 = scmp.ne.s32.totalorder %s68, %s70
      %p77 = scmp.eq.s32.totalorder %s18, 1
      %p78 = por %p76, %p77
      %p79 = scmp.ne.s32.totalorder %s70, %s71
      %p80 = scmp.eq.s32.totalorder %s18, 0
      %p81 = por %p79, %p80
      %p82 = scmp.ne.s32.totalorder %s70, %s71
      %p83 = scmp.eq.s32.totalorder %s19, 1
      %p84 = por %p82, %p83
      %p86 = scmp.ne.s32.totalorder %s71, %s85
      %p87 = scmp.eq.s32.totalorder %s19, 0
      %p88 = por %p86, %p87
      %s89 = ssub.s32 %s13, %s20
      %p90 = scmp.eq.s32.totalorder %s89, 0
      %s92 = sadd.s32 %s91, 1
      %s93 = scalar_select %p90, %s91, %s92
      %p96 = pneg %p90
      %p97 = scmp.eq.s32.totalorder %s13, 1
      %p98 = por %p96, %p97
      %p99 = scmp.ne.s32.totalorder %s91, %s94
      %p100 = scmp.eq.s32.totalorder %s13, 0
      %p101 = por %p99, %p100
      %p102 = scmp.ne.s32.totalorder %s91, %s94
      %p103 = scmp.eq.s32.totalorder %s18, 1
      %p104 = por %p102, %p103
      %p105 = scmp.ne.s32.totalorder %s94, %s95
      %p106 = scmp.eq.s32.totalorder %s18, 0
      %p107 = por %p105, %p106
      %p108 = scmp.ne.s32.totalorder %s94, %s95
      %p109 = scmp.eq.s32.totalorder %s19, 1
      %p110 = por %p108, %p109
      %p112 = scmp.ne.s32.totalorder %s95, %s111
      %p113 = scmp.eq.s32.totalorder %s19, 0
      %p114 = por %p112, %p113
      %p115 = scmp.le.s32.totalorder 1, %s13
      %p116 = scmp.lt.s32.totalorder %s13, 3
      %p117 = pnand %p115, %p116
      %p118 = pneg %p117
      // Predicated region
      $region9: #{tpu_custom_call.1} parent=5 // pred_check
        _
      $region10: #{tpu_custom_call.1} parent=5 // pred_check_branch
        %120 = sbr.rel (%p117) target = $region12
      $region11: #{tpu_custom_call.1} parent=5 // pred_region
        %s121 = ssub.s32 %s13, 1
        // Predicated region
        $region13: #{tpu_custom_call.1} parent=11 // pred_check
          %p122 = pneg %p60
        $region14: #{tpu_custom_call.1} parent=11 // pred_check_branch
          %124 = sbr.rel (%p122) target = $region16
        $region15: #{tpu_custom_call.1} parent=11 // pred_region
          %126 = vsyncadd [#allocation4], 0
          %s128 = sshll.u32 %s1, 4
          %s129 = int_to_ptr.hbm [resolvable:$true] %s128
          %s130 = sshll.u32 [#allocation3], 4
          %s131 = int_to_ptr.vmem [resolvable:$true] %s130
          %133 = dma.hbm_to_vmem [thread:$0]  %s129, 128, %s131, [#allocation4]
        $region16: #{tpu_custom_call.1} parent=11 // pred_fallthru
          _
        // Predicated region
        $region17: #{tpu_custom_call.1} parent=11 // pred_check
          %p134 = pneg %p81
        $region18: #{tpu_custom_call.1} parent=11 // pred_check_branch
          %136 = sbr.rel (%p134) target = $region20
        $region19: #{tpu_custom_call.1} parent=11 // pred_region
          _
        $region20: #{tpu_custom_call.1} parent=11 // pred_fallthru
          _
      $region12: #{tpu_custom_call.1} parent=5 // pred_fallthru
        _
      %p137 = scmp.lt.s32.totalorder %s13, 2
      // Predicated region
      $region21: #{tpu_custom_call.1} parent=5 // pred_check
        %p138 = pneg %p137
      $region22: #{tpu_custom_call.1} parent=5 // pred_check_branch
        %140 = sbr.rel (%p138) target = $region24
      $region23: #{tpu_custom_call.1} parent=5 // pred_region
        // Predicated region
        $region25: #{tpu_custom_call.1} parent=23 // pred_check
          %p141 = pneg %p33
        $region26: #{tpu_custom_call.1} parent=23 // pred_check_branch
          %143 = sbr.rel (%p141) target = $region28
        $region27: #{tpu_custom_call.1} parent=23 // pred_region
          %p144 = scmp.lt.s32.totalorder %s13, 1
          %s145 = scalar_select %p144, %s13, 1
          %s146 = smul.addr %s145, 4
          %s147 = scalar_lea.vmem %s0, %s146
        $region28: #{tpu_custom_call.1} parent=23 // pred_fallthru
          _
      $region24: #{tpu_custom_call.1} parent=5 // pred_fallthru
        _
      %p148 = scmp.le.s32.totalorder 1, %s13
      %p149 = scmp.lt.s32.totalorder %s13, 3
      %p150 = pnand %p148, %p149
      %p151 = pneg %p150
      // Predicated region
      $region29: #{tpu_custom_call.1} parent=5 // pred_check
        _
      $region30: #{tpu_custom_call.1} parent=5 // pred_check_branch
        %153 = sbr.rel (%p150) target = $region32
      $region31: #{tpu_custom_call.1} parent=5 // pred_region
        %s154 = ssub.s32 %s13, 1
        // Predicated region
        $region33: #{tpu_custom_call.1} parent=31 // pred_check
          %p155 = pneg %p60
        $region34: #{tpu_custom_call.1} parent=31 // pred_check_branch
          %157 = sbr.rel (%p155) target = $region36
        $region35: #{tpu_custom_call.1} parent=31 // pred_region
          %159 = dma.done [#allocation4], 128
        $region36: #{tpu_custom_call.1} parent=31 // pred_fallthru
          _
        %p160 = scmp.lt.s32.totalorder %s18, 1
        %s161 = scalar_select %p160, %s18, 1
        %s162 = smul.addr %s161, 4
        %s163 = scalar_lea.vmem %s0, %s162
        %p164 = pneg %p39
        %p165 = pneg %p36
        %p166 = pneg %p60
        %p167 = pneg %p57
        %p168 = pneg %p81
        %p169 = pneg %p78
        %p170 = pneg %p107
        %p171 = pneg %p104
        %s172 = sand.u32 %s94, 1
        %s173 = scalar_lea.sflag [#allocation5], %s172
        %s174 = sand.u32 %s94, 1
        %s175 = smul.addr %s174, 8
        %s176 = scalar_lea.vmem [#allocation6], %s175
        %p177 = scmp.lt.s32.totalorder %s18, 1
        %s178 = scalar_select %p177, %s18, 1
        %s179 = smul.addr %s178, 4
        %s180 = scalar_lea.vmem %s0, %s179
        %vm181 = vcmask 130048
        %182 = vst.msk [vmem:[#allocation2] sm:$0xff] %vm181, 0.0
        %183 = vst.msk [vmem:[#allocation2 + $0x8] sm:$0xff] %vm181, 0.0
        %184 = vst.msk [vmem:[#allocation2 + $0x10] sm:$0xff] %vm181, 0.0
        %v185 = vld [vmem:[%s180] sm:$0xf]
        %187 = vrot.lane.b32.xlu0 %v185, 1
        %v188 = vpop.permute.xlu0 %187
        %vm190 = vcmask 125960
        %191 = vst.msk [vmem:[#allocation2] sm:$0xf] %vm190, %v188
        %vm192 = vcmask 125952
        %193 = vst.msk [vmem:[#allocation2 + $0x8] sm:$0xf] %vm192, %v185
        %194 = vrot.lane.b32.xlu0 %v185, 127
        %v195 = vpop.permute.xlu0 %194
        %vm197 = vcmask 117760
        %198 = vst.msk [vmem:[#allocation2 + $0x10] sm:$0xf] %vm197, %v195
        %v199 = vld [vmem:[#allocation3] sm:$0xff]
        %v200 = vld [vmem:[#allocation2] sm:$0xff]
        %v201 = vld [vmem:[#allocation2 + $0x8] sm:$0xff]
        %v202 = vld [vmem:[#allocation2 + $0x10] sm:$0xff]
        %v203 = vld [vmem:[%s2] sm:$0xff]
        %205 = vset.pattern.permute.xlu0 0
        %206 = vperm.xlu0 %205, %v203
        %v207 = vpop.permute.xlu0 %206
        %vm209 = vcmask 195584
        %v211 = vsel %vm209, %v199, 0
        %213 = vmatpush.msra.mxu0 0.0
        %214 = vmatpush.msra.mxu0 0.0
        %215 = vmatpush.msra.mxu0 0.0
        %216 = vmatpush.msra.mxu0 0.0
        %217 = vmatpush.msra.mxu0 0.0
        %218 = vmatpush.msra.mxu0 0.0
        %219 = vmatpush.msra.mxu0 0.0
        %220 = vmatpush.msra.mxu0 0.0
        %221 = vmatpush.msra.mxu0 0.0
        %222 = vmatpush.msra.mxu0 0.0
        %223 = vmatpush.msra.mxu0 0.0
        %224 = vmatpush.msra.mxu0 0.0
        %225 = vmatpush.msra.mxu0 0.0
        %226 = vmatpush.msra.mxu0 %v202
        %227 = vmatpush.msra.mxu0 %v201
        %228 = vmatpush.msra.mxu0 %v200
        %229 = vmatmul.f32.gmra.mxu0 %v211
        %v230 = vpop.f32.mrf.mxu0
        %v231 = vadd.f32 %v207, %v230
        %232 = vdwg.mxu0
        %v233 = vmax.f32 %v231, 0.0
        %234 = vst.msk [vmem:[%s176] sm:$0xff] %vm181, %v233
        %s235 = sand.u32 %s94, 1
        %s236 = scalar_lea.sflag [#allocation5], %s235
        %s237 = sand.u32 %s94, 1
        %s238 = smul.addr %s237, 8
        %s239 = scalar_lea.vmem [#allocation6], %s238
        // Predicated region
        $region37: #{tpu_custom_call.1} parent=31 // pred_check
          %p240 = pneg %p104
        $region38: #{tpu_custom_call.1} parent=31 // pred_check_branch
          %242 = sbr.rel (%p240) target = $region40
        $region39: #{tpu_custom_call.1} parent=31 // pred_region
          %244 = vsyncadd %s236, 0
          %s245 = smul.addr %s18, 8
          %s246 = scalar_lea.hbm %s3, %s245
          %s248 = sshll.u32 %s239, 4
          %s249 = int_to_ptr.vmem [resolvable:$true] %s248
          %s250 = sshll.u32 %s246, 4
          %s251 = int_to_ptr.hbm [resolvable:$true] %s250
          %253 = dma.vmem_to_hbm [thread:$0]  %s249, 128, %s251, %s236
        $region40: #{tpu_custom_call.1} parent=31 // pred_fallthru
          _
      $region32: #{tpu_custom_call.1} parent=5 // pred_fallthru
        _
      %p254 = scmp.le.s32.totalorder 2, %s13
      // Predicated region
      $region41: #{tpu_custom_call.1} parent=5 // pred_check
        %p255 = pneg %p254
      $region42: #{tpu_custom_call.1} parent=5 // pred_check_branch
        %257 = sbr.rel (%p255) target = $region44
      $region43: #{tpu_custom_call.1} parent=5 // pred_region
        %s258 = ssub.s32 %s13, 2
        // Predicated region
        $region45: #{tpu_custom_call.1} parent=43 // pred_check
          %p259 = pneg %p110
        $region46: #{tpu_custom_call.1} parent=43 // pred_check_branch
          %261 = sbr.rel (%p259) target = $region48
        $region47: #{tpu_custom_call.1} parent=43 // pred_region
          %s262 = sand.u32 %s95, 1
          %s263 = scalar_lea.sflag [#allocation5], %s262
          %s264 = sand.u32 %s95, 1
          %s265 = smul.addr %s264, 8
          %s266 = scalar_lea.vmem [#allocation6], %s265
          %268 = dma.done %s263, 128
        $region48: #{tpu_custom_call.1} parent=43 // pred_fallthru
          _
      $region44: #{tpu_custom_call.1} parent=5 // pred_fallthru
        _
    $region6: #{tpu_custom_call.1} parent=1 // loop_footer
      %s17 = sadd.s32 1, %s13
    $region7: #{tpu_custom_call.1} parent=1 // loop_footer_branch
      %12 = sbr.rel target = $region3
    $region8: #{tpu_custom_call.1} parent=1 // loop_exit
      _
    %269 = vsyncpa [#allocation4], 1
    %s270 = scalar_lea.sflag [#allocation4], 1
    %271 = vsyncpa %s270, 1
    %272 = vsyncpa [#allocation5], 1
    %s273 = scalar_lea.sflag [#allocation5], 1
    %274 = vsyncpa %s273, 1

</llo_original>
